<compile_context>
chip_gen: v7x
topology: tpu7x:2x2x1
jax: 0.10.0
libtpu: 0.0.40
codegen_flags: <defaults>
</compile_context>

<pallas_src>
import functools

import jax
import jax.numpy as jnp
from jax.experimental import pallas as pl
from jax.experimental.pallas import tpu as pltpu


def _round_up(x: int, m: int) -> int:
    return (x + m - 1) // m * m


def _encode_kernel(x_ref, w_ref, b_ref, z_ref, acc_ref):
    # x_ref: [tm, tk] bf16   w_ref: [tk, tn] bf16
    # b_ref: [1,  tn] f32    z_ref: [tm, tn] f32    acc_ref: [tm, tn] f32 (VMEM scratch)
    k = pl.program_id(2)

    prod = jnp.dot(x_ref[...], w_ref[...], preferred_element_type=jnp.float32)

    @pl.when(k == 0)
    def _():
        acc_ref[...] = prod

    @pl.when(k != 0)
    def _():
        acc_ref[...] += prod

    @pl.when(k == pl.num_programs(2) - 1)
    def _():
        z_ref[...] = (acc_ref[...] + b_ref[...]).astype(z_ref.dtype)


@functools.partial(jax.jit, static_argnames=())
def encode(x_nchw: jax.Array, weight: jax.Array, bias: jax.Array) -> jax.Array:
    """Encode NCHW image batch into latent codes z = flatten(x) @ W + b."""
    B = x_nchw.shape[0]
    D = x_nchw.shape[1] * x_nchw.shape[2] * x_nchw.shape[3]
    Z = weight.shape[1]

    # Row-major flatten == torch .view(B, -1).
    x_flat = x_nchw.reshape(B, D)

    # ---- tile sizes ---------------------------------------------------------
    # M (batch): pad to >=16 rows (bf16 sublane packing); tile 16 for small B,
    #            128 for large B.
    tm = 16 if B <= 64 else 128
    Bp = _round_up(B, tm)
    # N (latent): lane-dense, multiple of 128; 256-wide tiles when possible
    #             (matches v6e/v7x MXU width; 128 is fine on v5e).
    Zp = _round_up(Z, 128)
    tn = 256 if Zp % 256 == 0 else 128
    # K (features): wide reduction tiles (up to 1024) keep per-grid-step
    #               overhead amortized; working set stays small.
    if D >= 1024:
        tk = 1024
    elif D >= 512:
        tk = 512
    else:
        tk = _round_up(D, 128)
    Dp = _round_up(D, tk)

    # ---- pad (zeros contribute nothing to the matmul) and cast to bf16 ------
    x_p = jnp.zeros((Bp, Dp), jnp.bfloat16).at[:B, :D].set(
        x_flat.astype(jnp.bfloat16))
    w_p = jnp.zeros((Dp, Zp), jnp.bfloat16).at[:D, :Z].set(
        weight.astype(jnp.bfloat16))
    b_p = jnp.zeros((1, Zp), jnp.float32).at[0, :Z].set(
        bias.astype(jnp.float32))

    grid = (Bp // tm, Zp // tn, Dp // tk)

    cost = pl.CostEstimate(
        flops=2 * Bp * Dp * Zp,
        transcendentals=0,
        bytes_accessed=x_p.size * 2 + w_p.size * 2 + b_p.size * 4 + Bp * Zp * 4,
    )

    z_p = pl.pallas_call(
        _encode_kernel,
        out_shape=jax.ShapeDtypeStruct((Bp, Zp), jnp.float32),
        grid_spec=pltpu.PrefetchScalarGridSpec(
            num_scalar_prefetch=0,
            grid=grid,
            in_specs=[
                pl.BlockSpec((tm, tk), lambda i, j, k: (i, k)),   # x
                pl.BlockSpec((tk, tn), lambda i, j, k: (k, j)),   # W
                pl.BlockSpec((1, tn), lambda i, j, k: (0, j)),    # bias
            ],
            out_specs=pl.BlockSpec((tm, tn), lambda i, j, k: (i, j)),
            scratch_shapes=[pltpu.VMEM((tm, tn), jnp.float32)],
        ),
        compiler_params=pltpu.CompilerParams(
            dimension_semantics=("parallel", "parallel", "arbitrary"),
            vmem_limit_bytes=64 * 1024 * 1024,
        ),
        cost_estimate=cost,
    )(x_p, w_p, b_p)

    # Slice padding back off.
    return z_p[:B, :Z]


if __name__ == "__main__":
    # Small deterministic shapes consistent with an image-encoder interface.
    B, C, H, W = 2, 4, 16, 16
    Z = 32
    D = C * H * W

    key = jax.random.PRNGKey(0)
    kx, kw, kb = jax.random.split(key, 3)

    x = jax.random.normal(kx, (B, C, H, W), dtype=jnp.float32)
    # Deterministic synthetic "parameters" for the concrete encoder head.
    weight = jax.random.normal(kw, (D, Z), dtype=jnp.float32) * 0.02
    bias = jax.random.normal(kb, (Z,), dtype=jnp.float32) * 0.01

    z = encode(x, weight, bias)
    z = jax.block_until_ready(z)

    # Reference with the same bf16 input quantization + f32 accumulation.
    x_q = x.reshape(B, D).astype(jnp.bfloat16).astype(jnp.float32)
    w_q = weight.astype(jnp.bfloat16).astype(jnp.float32)
    z_ref = x_q @ w_q + bias

    assert z.shape == (B, Z)
    assert jnp.allclose(z, z_ref, atol=2e-3, rtol=2e-3), (
        float(jnp.max(jnp.abs(z - z_ref))))

    print("KERNEL_OK")
</pallas_src>

<mosaic_0001>
module attributes {stable_mosaic.version = 11 : i64} {
  func.func @_encode_kernel(%arg0: i32, %arg1: i32, %arg2: i32, %arg3: memref<16x1024xbf16, #tpu.memory_space<vmem>>, %arg4: memref<1024x128xbf16, #tpu.memory_space<vmem>>, %arg5: memref<1x128xf32, #tpu.memory_space<vmem>>, %arg6: memref<16x128xf32, #tpu.memory_space<vmem>>, %arg7: memref<16x128xf32, #tpu.memory_space<vmem>>) attributes {dimension_semantics = [#tpu.dimension_semantics<parallel>, #tpu.dimension_semantics<parallel>, #tpu.dimension_semantics<arbitrary>], iteration_bounds = array<i64: 1, 1, 1>, scalar_prefetch = 0 : i64, scratch_operands = 1 : i64, tpu.core_type = #tpu.core_type<tc>, window_params = [{transform_indices = @transform_0, window_bounds = array<i64: 16, 1024>}, {transform_indices = @transform_1, window_bounds = array<i64: 1024, 128>}, {transform_indices = @transform_2, window_bounds = array<i64: 1, 128>}, {transform_indices = @transform_3, window_bounds = array<i64: 16, 128>}]} {
    %c0 = arith.constant 0 : index
    %c0_0 = arith.constant 0 : index
    %0 = vector.load %arg3[%c0, %c0_0] : memref<16x1024xbf16, #tpu.memory_space<vmem>>, vector<16x1024xbf16>
    %c0_1 = arith.constant 0 : index
    %c0_2 = arith.constant 0 : index
    %1 = vector.load %arg4[%c0_1, %c0_2] : memref<1024x128xbf16, #tpu.memory_space<vmem>>, vector<1024x128xbf16>
    %cst = arith.constant dense<0.000000e+00> : vector<16x128xf32>
    %2 = tpu.matmul %0, %1, %cst {dimension_numbers = #tpu.dot_dimension_numbers<[1], [0], [0], [1], [0, 0, 1, 1], [], []>} : vector<16x1024xbf16>, vector<1024x128xbf16>, vector<16x128xf32> -> vector<16x128xf32>
    %c0_i32 = arith.constant 0 : i32
    %3 = arith.cmpi eq, %arg2, %c0_i32 : i32
    %4 = arith.extui %3 : i1 to i32
    %c0_i32_3 = arith.constant 0 : i32
    %5 = arith.cmpi ne, %4, %c0_i32_3 : i32
    scf.if %5 {
      %c0_8 = arith.constant 0 : index
      %c0_9 = arith.constant 0 : index
      %12 = vector.load %arg7[%c0_8, %c0_9] : memref<16x128xf32, #tpu.memory_space<vmem>>, vector<16x128xf32>
      tpu.vector_store %arg7[%c0_8, %c0_9], %2 {strides = array<i32>} : memref<16x128xf32, #tpu.memory_space<vmem>>, vector<16x128xf32>,
    } else {
    }
    %c0_i32_4 = arith.constant 0 : i32
    %6 = arith.cmpi ne, %arg2, %c0_i32_4 : i32
    %7 = arith.extui %6 : i1 to i32
    %c0_i32_5 = arith.constant 0 : i32
    %8 = arith.cmpi ne, %7, %c0_i32_5 : i32
    scf.if %8 {
      %c0_8 = arith.constant 0 : index
      %c0_9 = arith.constant 0 : index
      %12 = vector.load %arg7[%c0_8, %c0_9] : memref<16x128xf32, #tpu.memory_space<vmem>>, vector<16x128xf32>
      %13 = arith.addf %12, %2 : vector<16x128xf32>
      %c0_10 = arith.constant 0 : index
      %c0_11 = arith.constant 0 : index
      %14 = vector.load %arg7[%c0_10, %c0_11] : memref<16x128xf32, #tpu.memory_space<vmem>>, vector<16x128xf32>
      tpu.vector_store %arg7[%c0_10, %c0_11], %13 {strides = array<i32>} : memref<16x128xf32, #tpu.memory_space<vmem>>, vector<16x128xf32>,
    } else {
    }
    %c0_i32_6 = arith.constant 0 : i32
    %9 = arith.cmpi eq, %arg2, %c0_i32_6 : i32
    %10 = arith.extui %9 : i1 to i32
    %c0_i32_7 = arith.constant 0 : i32
    %11 = arith.cmpi ne, %10, %c0_i32_7 : i32
    scf.if %11 {
      %c0_8 = arith.constant 0 : index
      %c0_9 = arith.constant 0 : index
      %12 = vector.load %arg7[%c0_8, %c0_9] : memref<16x128xf32, #tpu.memory_space<vmem>>, vector<16x128xf32>
      %c0_10 = arith.constant 0 : index
      %c0_11 = arith.constant 0 : index
      %13 = vector.load %arg5[%c0_10, %c0_11] : memref<1x128xf32, #tpu.memory_space<vmem>>, vector<1x128xf32>
      %14 = vector.broadcast %13 : vector<1x128xf32> to vector<16x128xf32>
      %15 = arith.addf %12, %14 : vector<16x128xf32>
      %c0_12 = arith.constant 0 : index
      %c0_13 = arith.constant 0 : index
      %16 = vector.load %arg6[%c0_12, %c0_13] : memref<16x128xf32, #tpu.memory_space<vmem>>, vector<16x128xf32>
      tpu.vector_store %arg6[%c0_12, %c0_13], %15 {strides = array<i32>} : memref<16x128xf32, #tpu.memory_space<vmem>>, vector<16x128xf32>,
    } else {
    }
    return
  }
  func.func @transform_0(%arg0: i32, %arg1: i32, %arg2: i32) -> (i32, i32) {
    %c0_i32 = arith.constant 0 : i32
    return %arg0, %arg2 : i32, i32
  }
  func.func @transform_1(%arg0: i32, %arg1: i32, %arg2: i32) -> (i32, i32) {
    %c0_i32 = arith.constant 0 : i32
    return %arg2, %arg1 : i32, i32
  }
  func.func @transform_2(%arg0: i32, %arg1: i32, %arg2: i32) -> (i32, i32) {
    %c0_i32 = arith.constant 0 : i32
    %c0_i32_0 = arith.constant 0 : i32
    return %c0_i32, %arg1 : i32, i32
  }
  func.func @transform_3(%arg0: i32, %arg1: i32, %arg2: i32) -> (i32, i32) {
    %c0_i32 = arith.constant 0 : i32
    return %arg0, %arg1 : i32, i32
  }
}

</mosaic_0001>

<llo_original>
// kernel: encode.1
$region0: #{encode.1}
  #allocation0 [shape = 'u32[]', space=smem, size = 0x4, offset = 0x4, fixed_abs, tag = 'smem constant byte address 0x4 - core index']
  #allocation1 [shape = 'u32[144,128]{1,0:T(1,128)}', space=vmem, size = 0x12000, scoped, tag = 'internal scratch']
  #allocation2 [shape = 'f32[16,128]{1,0:T(8,128)}', space=vmem, size = 0x2000, scoped, tag = 'scratch operand']
  %s0 = inlined_call_operand.hbm [shape: bf16[16,1024], index: 0, kind: input, shape index: {}]
  %s1 = inlined_call_operand.hbm [shape: bf16[1024,128], index: 1, kind: input, shape index: {}]
  %s2 = inlined_call_operand.hbm [shape: f32[1,128], index: 2, kind: input, shape index: {}]
  %s3 = inlined_call_operand.hbm [shape: f32[16,128], index: 3, kind: output, shape index: {}]
  %s4 = sld [smem:[#allocation0]]
  $region46: #{encode.1} parent=0
    _
  %s6 = ssub.s32 1, %s4
  %s7 = scalar_select 0, %s6, %s4
  $region1: #{encode.1} parent=0
    #allocation3 [shape = 'u8[32768]{0}', space=vmem, size = 0x8000, scoped, tag = 'input window, operand 0, single buffered']
    #allocation4 [shape = 's32[1]{0}', space=sflag, size = 0x4, scoped, tag = 'scoped memory for encode.1']
    #allocation5 [shape = 's32[1]{0}', space=sflag, size = 0x4, scoped, tag = 'scoped memory for encode.1']
    #allocation6 [shape = 'u8[262144]{0}', space=vmem, size = 0x40000, scoped, tag = 'input window, operand 1, single buffered']
    #allocation7 [shape = 's32[1]{0}', space=sflag, size = 0x4, scoped, tag = 'scoped memory for encode.1']
    #allocation8 [shape = 'u8[512]{0}', space=vmem, size = 0x400, scoped, tag = 'input window, operand 2, single buffered']
    #allocation9 [shape = 'u8[8192]{0}', space=vmem, size = 0x2000, scoped, tag = 'output window, operand 0, single buffered']
    %8 = vsyncpa [#allocation4], 0
    %9 = vsyncpa [#allocation7], 0
    %10 = vsyncpa [#allocation5], 0
    // Predicated region
    $region2: #{encode.1} parent=1 // pred_check
      _
    $region3: #{encode.1} parent=1 // pred_check_branch
      %12 = sbr.rel (0) target = $region5
    $region4: #{encode.1} parent=1 // pred_region
      %s14 = ssub.s32 1024, 1024
      %15 = vsyncadd [#allocation4], %s14
      %s16 = sshll.u32 [#allocation3], 4
      %s17 = int_to_ptr.vmem [resolvable:$true] %s16
      %22 = dma.hbm_to_vmem [thread:$0]  %s0, 1024, %s17, [#allocation4], 512, 512, 32
    $region5: #{encode.1} parent=1 // pred_fallthru
      _
    // Predicated region
    $region6: #{encode.1} parent=1 // pred_check
      _
    $region7: #{encode.1} parent=1 // pred_check_branch
      %24 = sbr.rel (0) target = $region9
    $region8: #{encode.1} parent=1 // pred_region
      %s26 = ssub.s32 8192, 8192
      %27 = vsyncadd [#allocation7], %s26
      %s28 = sshll.u32 [#allocation6], 4
      %s29 = int_to_ptr.vmem [resolvable:$true] %s28
      %34 = dma.hbm_to_vmem [thread:$0]  %s1, 8192, %s29, [#allocation7], 64, 64, 4
    $region9: #{encode.1} parent=1 // pred_fallthru
      _
    // Predicated region
    $region10: #{encode.1} parent=1 // pred_check
      _
    $region11: #{encode.1} parent=1 // pred_check_branch
      %36 = sbr.rel (0) target = $region13
    $region12: #{encode.1} parent=1 // pred_region
      %s38 = ssub.s32 16, 16
      %39 = vsyncadd [#allocation7], %s38
      %s41 = sshll.u32 [#allocation8], 4
      %s42 = int_to_ptr.vmem [resolvable:$true] %s41
      %44 = dma.hbm_to_vmem [thread:$0]  %s2, 16, %s42, [#allocation7]
    $region13: #{encode.1} parent=1 // pred_fallthru
      _
    // Predicated region
    $region14: #{encode.1} parent=1 // pred_check
      _
    $region15: #{encode.1} parent=1 // pred_check_branch
      %46 = sbr.rel (0) target = $region17
    $region16: #{encode.1} parent=1 // pred_region
      %47 = dma.done [#allocation4], 1024
    $region17: #{encode.1} parent=1 // pred_fallthru
      _
    // Predicated region
    $region18: #{encode.1} parent=1 // pred_check
      _
    $region19: #{encode.1} parent=1 // pred_check_branch
      %49 = sbr.rel (0) target = $region21
    $region20: #{encode.1} parent=1 // pred_region
      %50 = dma.done [#allocation7], 8192
    $region21: #{encode.1} parent=1 // pred_fallthru
      _
    // Predicated region
    $region22: #{encode.1} parent=1 // pred_check
      _
    $region23: #{encode.1} parent=1 // pred_check_branch
      %52 = sbr.rel (0) target = $region25
    $region24: #{encode.1} parent=1 // pred_region
      %53 = dma.done [#allocation7], 16
    $region25: #{encode.1} parent=1 // pred_fallthru
      _
    %v55 = vld [vmem:[#allocation3] sm:$0xff]
    %v56 = vld [vmem:[#allocation3 + $0x8] sm:$0xff]
    %v57 = vld [vmem:[#allocation3 + $0x10] sm:$0xff]
    %v58 = vld [vmem:[#allocation3 + $0x18] sm:$0xff]
    %v59 = vld [vmem:[#allocation3 + $0x20] sm:$0xff]
    %v60 = vld [vmem:[#allocation3 + $0x28] sm:$0xff]
    %v61 = vld [vmem:[#allocation3 + $0x30] sm:$0xff]
    %v62 = vld [vmem:[#allocation3 + $0x38] sm:$0xff]
    %v63 = vld [vmem:[#allocation6] sm:$0xf]
    %v64 = vld [vmem:[#allocation6 + $0x4] sm:$0xf]
    %v65 = vld [vmem:[#allocation6 + $0x8] sm:$0xf]
    %v66 = vld [vmem:[#allocation6 + $0xc] sm:$0xf]
    %v67 = vld [vmem:[#allocation6 + $0x10] sm:$0xf]
    %v68 = vld [vmem:[#allocation6 + $0x14] sm:$0xf]
    %v69 = vld [vmem:[#allocation6 + $0x18] sm:$0xf]
    %v70 = vld [vmem:[#allocation6 + $0x1c] sm:$0xf]
    %v71 = vld [vmem:[#allocation6 + $0x20] sm:$0xf]
    %v72 = vld [vmem:[#allocation6 + $0x24] sm:$0xf]
    %v73 = vld [vmem:[#allocation6 + $0x28] sm:$0xf]
    %v74 = vld [vmem:[#allocation6 + $0x2c] sm:$0xf]
    %v75 = vld [vmem:[#allocation6 + $0x30] sm:$0xf]
    %v76 = vld [vmem:[#allocation6 + $0x34] sm:$0xf]
    %v77 = vld [vmem:[#allocation6 + $0x38] sm:$0xf]
    %v78 = vld [vmem:[#allocation6 + $0x3c] sm:$0xf]
    %v79 = vld [vmem:[#allocation6 + $0x40] sm:$0xf]
    %v80 = vld [vmem:[#allocation6 + $0x44] sm:$0xf]
    %v81 = vld [vmem:[#allocation6 + $0x48] sm:$0xf]
    %v82 = vld [vmem:[#allocation6 + $0x4c] sm:$0xf]
    %v83 = vld [vmem:[#allocation6 + $0x50] sm:$0xf]
    %v84 = vld [vmem:[#allocation6 + $0x54] sm:$0xf]
    %v85 = vld [vmem:[#allocation6 + $0x58] sm:$0xf]
    %v86 = vld [vmem:[#allocation6 + $0x5c] sm:$0xf]
    %v87 = vld [vmem:[#allocation6 + $0x60] sm:$0xf]
    %v88 = vld [vmem:[#allocation6 + $0x64] sm:$0xf]
    %v89 = vld [vmem:[#allocation6 + $0x68] sm:$0xf]
    %v90 = vld [vmem:[#allocation6 + $0x6c] sm:$0xf]
    %v91 = vld [vmem:[#allocation6 + $0x70] sm:$0xf]
    %v92 = vld [vmem:[#allocation6 + $0x74] sm:$0xf]
    %v93 = vld [vmem:[#allocation6 + $0x78] sm:$0xf]
    %v94 = vld [vmem:[#allocation6 + $0x7c] sm:$0xf]
    %v95 = vld [vmem:[#allocation6 + $0x80] sm:$0xf]
    %v96 = vld [vmem:[#allocation6 + $0x84] sm:$0xf]
    %v97 = vld [vmem:[#allocation6 + $0x88] sm:$0xf]
    %v98 = vld [vmem:[#allocation6 + $0x8c] sm:$0xf]
    %v99 = vld [vmem:[#allocation6 + $0x90] sm:$0xf]
    %v100 = vld [vmem:[#allocation6 + $0x94] sm:$0xf]
    %v101 = vld [vmem:[#allocation6 + $0x98] sm:$0xf]
    %v102 = vld [vmem:[#allocation6 + $0x9c] sm:$0xf]
    %v103 = vld [vmem:[#allocation6 + $0xa0] sm:$0xf]
    %v104 = vld [vmem:[#allocation6 + $0xa4] sm:$0xf]
    %v105 = vld [vmem:[#allocation6 + $0xa8] sm:$0xf]
    %v106 = vld [vmem:[#allocation6 + $0xac] sm:$0xf]
    %v107 = vld [vmem:[#allocation6 + $0xb0] sm:$0xf]
    %v108 = vld [vmem:[#allocation6 + $0xb4] sm:$0xf]
    %v109 = vld [vmem:[#allocation6 + $0xb8] sm:$0xf]
    %v110 = vld [vmem:[#allocation6 + $0xbc] sm:$0xf]
    %v111 = vld [vmem:[#allocation6 + $0xc0] sm:$0xf]
    %v112 = vld [vmem:[#allocation6 + $0xc4] sm:$0xf]
    %v113 = vld [vmem:[#allocation6 + $0xc8] sm:$0xf]
    %v114 = vld [vmem:[#allocation6 + $0xcc] sm:$0xf]
    %v115 = vld [vmem:[#allocation6 + $0xd0] sm:$0xf]
    %v116 = vld [vmem:[#allocation6 + $0xd4] sm:$0xf]
    %v117 = vld [vmem:[#allocation6 + $0xd8] sm:$0xf]
    %v118 = vld [vmem:[#allocation6 + $0xdc] sm:$0xf]
    %v119 = vld [vmem:[#allocation6 + $0xe0] sm:$0xf]
    %v120 = vld [vmem:[#allocation6 + $0xe4] sm:$0xf]
    %v121 = vld [vmem:[#allocation6 + $0xe8] sm:$0xf]
    %v122 = vld [vmem:[#allocation6 + $0xec] sm:$0xf]
    %v123 = vld [vmem:[#allocation6 + $0xf0] sm:$0xf]
    %v124 = vld [vmem:[#allocation6 + $0xf4] sm:$0xf]
    %v125 = vld [vmem:[#allocation6 + $0xf8] sm:$0xf]
    %v126 = vld [vmem:[#allocation6 + $0xfc] sm:$0xf]
    %v127 = vld [vmem:[#allocation6 + $0x100] sm:$0xf]
    %v128 = vld [vmem:[#allocation6 + $0x104] sm:$0xf]
    %v129 = vld [vmem:[#allocation6 + $0x108] sm:$0xf]
    %v130 = vld [vmem:[#allocation6 + $0x10c] sm:$0xf]
    %v131 = vld [vmem:[#allocation6 + $0x110] sm:$0xf]
    %v132 = vld [vmem:[#allocation6 + $0x114] sm:$0xf]
    %v133 = vld [vmem:[#allocation6 + $0x118] sm:$0xf]
    %v134 = vld [vmem:[#allocation6 + $0x11c] sm:$0xf]
    %v135 = vld [vmem:[#allocation6 + $0x120] sm:$0xf]
    %v136 = vld [vmem:[#allocation6 + $0x124] sm:$0xf]
    %v137 = vld [vmem:[#allocation6 + $0x128] sm:$0xf]
    %v138 = vld [vmem:[#allocation6 + $0x12c] sm:$0xf]
    %v139 = vld [vmem:[#allocation6 + $0x130] sm:$0xf]
    %v140 = vld [vmem:[#allocation6 + $0x134] sm:$0xf]
    %v141 = vld [vmem:[#allocation6 + $0x138] sm:$0xf]
    %v142 = vld [vmem:[#allocation6 + $0x13c] sm:$0xf]
    %v143 = vld [vmem:[#allocation6 + $0x140] sm:$0xf]
    %v144 = vld [vmem:[#allocation6 + $0x144] sm:$0xf]
    %v145 = vld [vmem:[#allocation6 + $0x148] sm:$0xf]
    %v146 = vld [vmem:[#allocation6 + $0x14c] sm:$0xf]
    %v147 = vld [vmem:[#allocation6 + $0x150] sm:$0xf]
    %v148 = vld [vmem:[#allocation6 + $0x154] sm:$0xf]
    %v149 = vld [vmem:[#allocation6 + $0x158] sm:$0xf]
    %v150 = vld [vmem:[#allocation6 + $0x15c] sm:$0xf]
    %v151 = vld [vmem:[#allocation6 + $0x160] sm:$0xf]
    %v152 = vld [vmem:[#allocation6 + $0x164] sm:$0xf]
    %v153 = vld [vmem:[#allocation6 + $0x168] sm:$0xf]
    %v154 = vld [vmem:[#allocation6 + $0x16c] sm:$0xf]
    %v155 = vld [vmem:[#allocation6 + $0x170] sm:$0xf]
    %v156 = vld [vmem:[#allocation6 + $0x174] sm:$0xf]
    %v157 = vld [vmem:[#allocation6 + $0x178] sm:$0xf]
    %v158 = vld [vmem:[#allocation6 + $0x17c] sm:$0xf]
    %v159 = vld [vmem:[#allocation6 + $0x180] sm:$0xf]
    %v160 = vld [vmem:[#allocation6 + $0x184] sm:$0xf]
    %v161 = vld [vmem:[#allocation6 + $0x188] sm:$0xf]
    %v162 = vld [vmem:[#allocation6 + $0x18c] sm:$0xf]
    %v163 = vld [vmem:[#allocation6 + $0x190] sm:$0xf]
    %v164 = vld [vmem:[#allocation6 + $0x194] sm:$0xf]
    %v165 = vld [vmem:[#allocation6 + $0x198] sm:$0xf]
    %v166 = vld [vmem:[#allocation6 + $0x19c] sm:$0xf]
    %v167 = vld [vmem:[#allocation6 + $0x1a0] sm:$0xf]
    %v168 = vld [vmem:[#allocation6 + $0x1a4] sm:$0xf]
    %v169 = vld [vmem:[#allocation6 + $0x1a8] sm:$0xf]
    %v170 = vld [vmem:[#allocation6 + $0x1ac] sm:$0xf]
    %v171 = vld [vmem:[#allocation6 + $0x1b0] sm:$0xf]
    %v172 = vld [vmem:[#allocation6 + $0x1b4] sm:$0xf]
    %v173 = vld [vmem:[#allocation6 + $0x1b8] sm:$0xf]
    %v174 = vld [vmem:[#allocation6 + $0x1bc] sm:$0xf]
    %v175 = vld [vmem:[#allocation6 + $0x1c0] sm:$0xf]
    %v176 = vld [vmem:[#allocation6 + $0x1c4] sm:$0xf]
    %v177 = vld [vmem:[#allocation6 + $0x1c8] sm:$0xf]
    %v178 = vld [vmem:[#allocation6 + $0x1cc] sm:$0xf]
    %v179 = vld [vmem:[#allocation6 + $0x1d0] sm:$0xf]
    %v180 = vld [vmem:[#allocation6 + $0x1d4] sm:$0xf]
    %v181 = vld [vmem:[#allocation6 + $0x1d8] sm:$0xf]
    %v182 = vld [vmem:[#allocation6 + $0x1dc] sm:$0xf]
    %v183 = vld [vmem:[#allocation6 + $0x1e0] sm:$0xf]
    %v184 = vld [vmem:[#allocation6 + $0x1e4] sm:$0xf]
    %v185 = vld [vmem:[#allocation6 + $0x1e8] sm:$0xf]
    %v186 = vld [vmem:[#allocation6 + $0x1ec] sm:$0xf]
    %v187 = vld [vmem:[#allocation6 + $0x1f0] sm:$0xf]
    %v188 = vld [vmem:[#allocation6 + $0x1f4] sm:$0xf]
    %v189 = vld [vmem:[#allocation6 + $0x1f8] sm:$0xf]
    %v190 = vld [vmem:[#allocation6 + $0x1fc] sm:$0xf]
    %v199 = vunpack.c.l.b16 %v55
    %v200 = vunpack.c.h.b16 %v55
    %v201 = vunpack.c.l.b16 %v56
    %v202 = vunpack.c.h.b16 %v56
    %v203 = vunpack.c.l.b16 %v57
    %v204 = vunpack.c.h.b16 %v57
    %v205 = vunpack.c.l.b16 %v58
    %v206 = vunpack.c.h.b16 %v58
    %v207 = vunpack.c.l.b16 %v59
    %v208 = vunpack.c.h.b16 %v59
    %v209 = vunpack.c.l.b16 %v60
    %v210 = vunpack.c.h.b16 %v60
    %v211 = vunpack.c.l.b16 %v61
    %v212 = vunpack.c.h.b16 %v61
    %v213 = vunpack.c.l.b16 %v62
    %v214 = vunpack.c.h.b16 %v62
    %v215 = vpack.c.b16 %v207, %v199
    %v216 = vpack.c.b16 %v208, %v200
    %v217 = vpack.c.b16 %v209, %v201
    %v218 = vpack.c.b16 %v210, %v202
    %v219 = vpack.c.b16 %v211, %v203
    %v220 = vpack.c.b16 %v212, %v204
    %v221 = vpack.c.b16 %v213, %v205
    %v222 = vpack.c.b16 %v214, %v206
    %v359 = vunpack.c.l.b16 %v63
    %v360 = vunpack.c.l.b16 %v64
    %v361 = vunpack.c.l.b16 %v65
    %v362 = vunpack.c.l.b16 %v66
    %v363 = vunpack.c.l.b16 %v67
    %v364 = vunpack.c.l.b16 %v68
    %v365 = vunpack.c.l.b16 %v69
    %v366 = vunpack.c.l.b16 %v70
    %v367 = vunpack.c.l.b16 %v71
    %v368 = vunpack.c.l.b16 %v72
    %v369 = vunpack.c.l.b16 %v73
    %v370 = vunpack.c.l.b16 %v74
    %v371 = vunpack.c.l.b16 %v75
    %v372 = vunpack.c.l.b16 %v76
    %v373 = vunpack.c.l.b16 %v77
    %v374 = vunpack.c.l.b16 %v78
    %v375 = vunpack.c.l.b16 %v79
    %v376 = vunpack.c.l.b16 %v80
    %v377 = vunpack.c.l.b16 %v81
    %v378 = vunpack.c.l.b16 %v82
    %v379 = vunpack.c.l.b16 %v83
    %v380 = vunpack.c.l.b16 %v84
    %v381 = vunpack.c.l.b16 %v85
    %v382 = vunpack.c.l.b16 %v86
    %v383 = vunpack.c.l.b16 %v87
    %v384 = vunpack.c.l.b16 %v88
    %v385 = vunpack.c.l.b16 %v89
    %v386 = vunpack.c.l.b16 %v90
    %v387 = vunpack.c.l.b16 %v91
    %v388 = vunpack.c.l.b16 %v92
    %v389 = vunpack.c.l.b16 %v93
    %v390 = vunpack.c.l.b16 %v94
    %v391 = vunpack.c.l.b16 %v95
    %v392 = vunpack.c.l.b16 %v96
    %v393 = vunpack.c.l.b16 %v97
    %v394 = vunpack.c.l.b16 %v98
    %v395 = vunpack.c.l.b16 %v99
    %v396 = vunpack.c.l.b16 %v100
    %v397 = vunpack.c.l.b16 %v101
    %v398 = vunpack.c.l.b16 %v102
    %v399 = vunpack.c.l.b16 %v103
    %v400 = vunpack.c.l.b16 %v104
    %v401 = vunpack.c.l.b16 %v105
    %v402 = vunpack.c.l.b16 %v106
    %v403 = vunpack.c.l.b16 %v107
    %v404 = vunpack.c.l.b16 %v108
    %v405 = vunpack.c.l.b16 %v109
    %v406 = vunpack.c.l.b16 %v110
    %v407 = vunpack.c.l.b16 %v111
    %v408 = vunpack.c.l.b16 %v112
    %v409 = vunpack.c.l.b16 %v113
    %v410 = vunpack.c.l.b16 %v114
    %v411 = vunpack.c.l.b16 %v115
    %v412 = vunpack.c.l.b16 %v116
    %v413 = vunpack.c.l.b16 %v117
    %v414 = vunpack.c.l.b16 %v118
    %v415 = vunpack.c.l.b16 %v119
    %v416 = vunpack.c.l.b16 %v120
    %v417 = vunpack.c.l.b16 %v121
    %v418 = vunpack.c.l.b16 %v122
    %v419 = vunpack.c.l.b16 %v123
    %v420 = vunpack.c.l.b16 %v124
    %v421 = vunpack.c.l.b16 %v125
    %v422 = vunpack.c.l.b16 %v126
    %v423 = vunpack.c.l.b16 %v127
    %v424 = vunpack.c.l.b16 %v128
    %v425 = vunpack.c.l.b16 %v129
    %v426 = vunpack.c.l.b16 %v130
    %v427 = vunpack.c.l.b16 %v131
    %v428 = vunpack.c.l.b16 %v132
    %v429 = vunpack.c.l.b16 %v133
    %v430 = vunpack.c.l.b16 %v134
    %v431 = vunpack.c.l.b16 %v135
    %v432 = vunpack.c.l.b16 %v136
    %v433 = vunpack.c.l.b16 %v137
    %v434 = vunpack.c.l.b16 %v138
    %v435 = vunpack.c.l.b16 %v139
    %v436 = vunpack.c.l.b16 %v140
    %v437 = vunpack.c.l.b16 %v141
    %v438 = vunpack.c.l.b16 %v142
    %v439 = vunpack.c.l.b16 %v143
    %v440 = vunpack.c.l.b16 %v144
    %v441 = vunpack.c.l.b16 %v145
    %v442 = vunpack.c.l.b16 %v146
    %v443 = vunpack.c.l.b16 %v147
    %v444 = vunpack.c.l.b16 %v148
    %v445 = vunpack.c.l.b16 %v149
    %v446 = vunpack.c.l.b16 %v150
    %v447 = vunpack.c.l.b16 %v151
    %v448 = vunpack.c.l.b16 %v152
    %v449 = vunpack.c.l.b16 %v153
    %v450 = vunpack.c.l.b16 %v154
    %v451 = vunpack.c.l.b16 %v155
    %v452 = vunpack.c.l.b16 %v156
    %v453 = vunpack.c.l.b16 %v157
    %v454 = vunpack.c.l.b16 %v158
    %v455 = vunpack.c.l.b16 %v159
    %v456 = vunpack.c.l.b16 %v160
    %v457 = vunpack.c.l.b16 %v161
    %v458 = vunpack.c.l.b16 %v162
    %v459 = vunpack.c.l.b16 %v163
    %v460 = vunpack.c.l.b16 %v164
    %v461 = vunpack.c.l.b16 %v165
    %v462 = vunpack.c.l.b16 %v166
    %v463 = vunpack.c.l.b16 %v167
    %v464 = vunpack.c.l.b16 %v168
    %v465 = vunpack.c.l.b16 %v169
    %v466 = vunpack.c.l.b16 %v170
    %v467 = vunpack.c.l.b16 %v171
    %v468 = vunpack.c.l.b16 %v172
    %v469 = vunpack.c.l.b16 %v173
    %v470 = vunpack.c.l.b16 %v174
    %v471 = vunpack.c.l.b16 %v175
    %v472 = vunpack.c.l.b16 %v176
    %v473 = vunpack.c.l.b16 %v177
    %v474 = vunpack.c.l.b16 %v178
    %v475 = vunpack.c.l.b16 %v179
    %v476 = vunpack.c.l.b16 %v180
    %v477 = vunpack.c.l.b16 %v181
    %v478 = vunpack.c.l.b16 %v182
    %v479 = vunpack.c.l.b16 %v183
    %v480 = vunpack.c.l.b16 %v184
    %v481 = vunpack.c.l.b16 %v185
    %v482 = vunpack.c.l.b16 %v186
    %v483 = vunpack.c.l.b16 %v187
    %v484 = vunpack.c.l.b16 %v188
    %v485 = vunpack.c.l.b16 %v189
    %v486 = vunpack.c.l.b16 %v190
    %v487 = vpack.c.b16 %v360, %v359
    %v488 = vpack.c.b16 %v362, %v361
    %v489 = vpack.c.b16 %v364, %v363
    %v490 = vpack.c.b16 %v366, %v365
    %v491 = vpack.c.b16 %v368, %v367
    %v492 = vpack.c.b16 %v370, %v369
    %v493 = vpack.c.b16 %v372, %v371
    %v494 = vpack.c.b16 %v374, %v373
    %v495 = vpack.c.b16 %v376, %v375
    %v496 = vpack.c.b16 %v378, %v377
    %v497 = vpack.c.b16 %v380, %v379
    %v498 = vpack.c.b16 %v382, %v381
    %v499 = vpack.c.b16 %v384, %v383
    %v500 = vpack.c.b16 %v386, %v385
    %v501 = vpack.c.b16 %v388, %v387
    %v502 = vpack.c.b16 %v390, %v389
    %v503 = vpack.c.b16 %v392, %v391
    %v504 = vpack.c.b16 %v394, %v393
    %v505 = vpack.c.b16 %v396, %v395
    %v506 = vpack.c.b16 %v398, %v397
    %v507 = vpack.c.b16 %v400, %v399
    %v508 = vpack.c.b16 %v402, %v401
    %v509 = vpack.c.b16 %v404, %v403
    %v510 = vpack.c.b16 %v406, %v405
    %v511 = vpack.c.b16 %v408, %v407
    %v512 = vpack.c.b16 %v410, %v409
    %v513 = vpack.c.b16 %v412, %v411
    %v514 = vpack.c.b16 %v414, %v413
    %v515 = vpack.c.b16 %v416, %v415
    %v516 = vpack.c.b16 %v418, %v417
    %v517 = vpack.c.b16 %v420, %v419
    %v518 = vpack.c.b16 %v422, %v421
    %v519 = vpack.c.b16 %v424, %v423
    %v520 = vpack.c.b16 %v426, %v425
    %v521 = vpack.c.b16 %v428, %v427
    %v522 = vpack.c.b16 %v430, %v429
    %v523 = vpack.c.b16 %v432, %v431
    %v524 = vpack.c.b16 %v434, %v433
    %v525 = vpack.c.b16 %v436, %v435
    %v526 = vpack.c.b16 %v438, %v437
    %v527 = vpack.c.b16 %v440, %v439
    %v528 = vpack.c.b16 %v442, %v441
    %v529 = vpack.c.b16 %v444, %v443
    %v530 = vpack.c.b16 %v446, %v445
    %v531 = vpack.c.b16 %v448, %v447
    %v532 = vpack.c.b16 %v450, %v449
    %v533 = vpack.c.b16 %v452, %v451
    %v534 = vpack.c.b16 %v454, %v453
    %v535 = vpack.c.b16 %v456, %v455
    %v536 = vpack.c.b16 %v458, %v457
    %v537 = vpack.c.b16 %v460, %v459
    %v538 = vpack.c.b16 %v462, %v461
    %v539 = vpack.c.b16 %v464, %v463
    %v540 = vpack.c.b16 %v466, %v465
    %v541 = vpack.c.b16 %v468, %v467
    %v542 = vpack.c.b16 %v470, %v469
    %v543 = vpack.c.b16 %v472, %v471
    %v544 = vpack.c.b16 %v474, %v473
    %v545 = vpack.c.b16 %v476, %v475
    %v546 = vpack.c.b16 %v478, %v477
    %v547 = vpack.c.b16 %v480, %v479
    %v548 = vpack.c.b16 %v482, %v481
    %v549 = vpack.c.b16 %v484, %v483
    %v550 = vpack.c.b16 %v486, %v485
    %615 = vmatprep.subr.bf16.mxu0 0
    %616 = vmatpush1.bf16.msra.mxu0 %v487
    %617 = vmatprep.subr.bf16.mxu0 0
    %618 = vmatpush1.bf16.msra.mxu0 %v488
    %619 = vmatprep.subr.bf16.mxu0 0
    %620 = vmatpush1.bf16.msra.mxu0 %v489
    %621 = vmatprep.subr.bf16.mxu0 0
    %622 = vmatpush1.bf16.msra.mxu0 %v490
    %623 = vmatprep.subr.bf16.mxu0 0
    %624 = vmatpush1.bf16.msra.mxu0 %v491
    %625 = vmatprep.subr.bf16.mxu0 0
    %626 = vmatpush1.bf16.msra.mxu0 %v492
    %627 = vmatprep.subr.bf16.mxu0 0
    %628 = vmatpush1.bf16.msra.mxu0 %v493
    %629 = vmatprep.subr.bf16.mxu0 0
    %630 = vmatpush1.bf16.msra.mxu0 %v494
    %631 = vmatprep.subr.bf16.mxu0 0
    %632 = vmatpush1.bf16.msra.mxu0 %v495
    %633 = vmatprep.subr.bf16.mxu0 0
    %634 = vmatpush1.bf16.msra.mxu0 %v496
    %635 = vmatprep.subr.bf16.mxu0 0
    %636 = vmatpush1.bf16.msra.mxu0 %v497
    %637 = vmatprep.subr.bf16.mxu0 0
    %638 = vmatpush1.bf16.msra.mxu0 %v498
    %639 = vmatprep.subr.bf16.mxu0 0
    %640 = vmatpush1.bf16.msra.mxu0 %v499
    %641 = vmatprep.subr.bf16.mxu0 0
    %642 = vmatpush1.bf16.msra.mxu0 %v500
    %643 = vmatprep.subr.bf16.mxu0 0
    %644 = vmatpush1.bf16.msra.mxu0 %v501
    %645 = vmatprep.subr.bf16.mxu0 0
    %646 = vmatpush1.bf16.msra.mxu0 %v502
    %647 = vmatprep.mubr.bf16.mxu0 %v216
    %648 = vmatmul.mubr.bf16.gmra.mrb[0].mxu0 %v215
    %v649 = vpop.f32.mrb[0].mxu0
    %v650 = vadd.f32 0.0, %v649
    %v651 = vpop.f32.mrb[0].mxu0
    %v652 = vpop.f32.mrb[0].mxu0
    %v653 = vadd.f32 0.0, %v652
    %v654 = vpop.f32.mrb[0].mxu0
    %655 = vdwg.mxu0
    %656 = vmatprep.subr.bf16.mxu0 0
    %657 = vmatpush1.bf16.msra.mxu0 %v503
    %658 = vmatprep.subr.bf16.mxu0 0
    %659 = vmatpush1.bf16.msra.mxu0 %v504
    %660 = vmatprep.subr.bf16.mxu0 0
    %661 = vmatpush1.bf16.msra.mxu0 %v505
    %662 = vmatprep.subr.bf16.mxu0 0
    %663 = vmatpush1.bf16.msra.mxu0 %v506
    %664 = vmatprep.subr.bf16.mxu0 0
    %665 = vmatpush1.bf16.msra.mxu0 %v507
    %666 = vmatprep.subr.bf16.mxu0 0
    %667 = vmatpush1.bf16.msra.mxu0 %v508
    %668 = vmatprep.subr.bf16.mxu0 0
    %669 = vmatpush1.bf16.msra.mxu0 %v509
    %670 = vmatprep.subr.bf16.mxu0 0
    %671 = vmatpush1.bf16.msra.mxu0 %v510
    %672 = vmatprep.subr.bf16.mxu0 0
    %673 = vmatpush1.bf16.msra.mxu0 %v511
    %674 = vmatprep.subr.bf16.mxu0 0
    %675 = vmatpush1.bf16.msra.mxu0 %v512
    %676 = vmatprep.subr.bf16.mxu0 0
    %677 = vmatpush1.bf16.msra.mxu0 %v513
    %678 = vmatprep.subr.bf16.mxu0 0
    %679 = vmatpush1.bf16.msra.mxu0 %v514
    %680 = vmatprep.subr.bf16.mxu0 0
    %681 = vmatpush1.bf16.msra.mxu0 %v515
    %682 = vmatprep.subr.bf16.mxu0 0
    %683 = vmatpush1.bf16.msra.mxu0 %v516
    %684 = vmatprep.subr.bf16.mxu0 0
    %685 = vmatpush1.bf16.msra.mxu0 %v517
    %686 = vmatprep.subr.bf16.mxu0 0
    %687 = vmatpush1.bf16.msra.mxu0 %v518
    %688 = vmatprep.mubr.bf16.mxu0 %v218
    %689 = vmatmul.mubr.bf16.gmra.mrb[0].mxu0 %v217
    %v690 = vpop.f32.mrb[0].mxu0
    %v691 = vadd.f32 %v650, %v690
    %v692 = vpop.f32.mrb[0].mxu0
    %v693 = vpop.f32.mrb[0].mxu0
    %v694 = vadd.f32 %v653, %v693
    %v695 = vpop.f32.mrb[0].mxu0
    %696 = vdwg.mxu0
    %697 = vmatprep.subr.bf16.mxu0 0
    %698 = vmatpush1.bf16.msra.mxu0 %v519
    %699 = vmatprep.subr.bf16.mxu0 0
    %700 = vmatpush1.bf16.msra.mxu0 %v520
    %701 = vmatprep.subr.bf16.mxu0 0
    %702 = vmatpush1.bf16.msra.mxu0 %v521
    %703 = vmatprep.subr.bf16.mxu0 0
    %704 = vmatpush1.bf16.msra.mxu0 %v522
    %705 = vmatprep.subr.bf16.mxu0 0
    %706 = vmatpush1.bf16.msra.mxu0 %v523
    %707 = vmatprep.subr.bf16.mxu0 0
    %708 = vmatpush1.bf16.msra.mxu0 %v524
    %709 = vmatprep.subr.bf16.mxu0 0
    %710 = vmatpush1.bf16.msra.mxu0 %v525
    %711 = vmatprep.subr.bf16.mxu0 0
    %712 = vmatpush1.bf16.msra.mxu0 %v526
    %713 = vmatprep.subr.bf16.mxu0 0
    %714 = vmatpush1.bf16.msra.mxu0 %v527
    %715 = vmatprep.subr.bf16.mxu0 0
    %716 = vmatpush1.bf16.msra.mxu0 %v528
    %717 = vmatprep.subr.bf16.mxu0 0
    %718 = vmatpush1.bf16.msra.mxu0 %v529
    %719 = vmatprep.subr.bf16.mxu0 0
    %720 = vmatpush1.bf16.msra.mxu0 %v530
    %721 = vmatprep.subr.bf16.mxu0 0
    %722 = vmatpush1.bf16.msra.mxu0 %v531
    %723 = vmatprep.subr.bf16.mxu0 0
    %724 = vmatpush1.bf16.msra.mxu0 %v532
    %725 = vmatprep.subr.bf16.mxu0 0
    %726 = vmatpush1.bf16.msra.mxu0 %v533
    %727 = vmatprep.subr.bf16.mxu0 0
    %728 = vmatpush1.bf16.msra.mxu0 %v534
    %729 = vmatprep.mubr.bf16.mxu0 %v220
    %730 = vmatmul.mubr.bf16.gmra.mrb[0].mxu0 %v219
    %v731 = vpop.f32.mrb[0].mxu0
    %v732 = vadd.f32 %v691, %v731
    %v733 = vpop.f32.mrb[0].mxu0
    %v734 = vpop.f32.mrb[0].mxu0
    %v735 = vadd.f32 %v694, %v734
    %v736 = vpop.f32.mrb[0].mxu0
    %737 = vdwg.mxu0
    %738 = vmatprep.subr.bf16.mxu0 0
    %739 = vmatpush1.bf16.msra.mxu0 %v535
    %740 = vmatprep.subr.bf16.mxu0 0
    %741 = vmatpush1.bf16.msra.mxu0 %v536
    %742 = vmatprep.subr.bf16.mxu0 0
    %743 = vmatpush1.bf16.msra.mxu0 %v537
    %744 = vmatprep.subr.bf16.mxu0 0
    %745 = vmatpush1.bf16.msra.mxu0 %v538
    %746 = vmatprep.subr.bf16.mxu0 0
    %747 = vmatpush1.bf16.msra.mxu0 %v539
    %748 = vmatprep.subr.bf16.mxu0 0
    %749 = vmatpush1.bf16.msra.mxu0 %v540
    %750 = vmatprep.subr.bf16.mxu0 0
    %751 = vmatpush1.bf16.msra.mxu0 %v541
    %752 = vmatprep.subr.bf16.mxu0 0
    %753 = vmatpush1.bf16.msra.mxu0 %v542
    %754 = vmatprep.subr.bf16.mxu0 0
    %755 = vmatpush1.bf16.msra.mxu0 %v543
    %756 = vmatprep.subr.bf16.mxu0 0
    %757 = vmatpush1.bf16.msra.mxu0 %v544
    %758 = vmatprep.subr.bf16.mxu0 0
    %759 = vmatpush1.bf16.msra.mxu0 %v545
    %760 = vmatprep.subr.bf16.mxu0 0
    %761 = vmatpush1.bf16.msra.mxu0 %v546
    %762 = vmatprep.subr.bf16.mxu0 0
    %763 = vmatpush1.bf16.msra.mxu0 %v547
    %764 = vmatprep.subr.bf16.mxu0 0
    %765 = vmatpush1.bf16.msra.mxu0 %v548
    %766 = vmatprep.subr.bf16.mxu0 0
    %767 = vmatpush1.bf16.msra.mxu0 %v549
    %768 = vmatprep.subr.bf16.mxu0 0
    %769 = vmatpush1.bf16.msra.mxu0 %v550
    %770 = vmatprep.mubr.bf16.mxu0 %v222
    %771 = vmatmul.mubr.bf16.gmra.mrb[0].mxu0 %v221
    %v772 = vpop.f32.mrb[0].mxu0
    %v773 = vadd.f32 %v732, %v772
    %v774 = vpop.f32.mrb[0].mxu0
    %v775 = vpop.f32.mrb[0].mxu0
    %v776 = vadd.f32 %v735, %v775
    %v777 = vpop.f32.mrb[0].mxu0
    %778 = vdwg.mxu0
    %p779 = scmp.eq.s32.totalorder 0, 0
    // Predicated region
    $region26: #{encode.1} parent=1 // pred_check
      %p780 = pneg %p779
    $region27: #{encode.1} parent=1 // pred_check_branch
      %782 = sbr.rel (%p780) target = $region29
    $region28: #{encode.1} parent=1 // pred_region
      %783 = vst [vmem:[#allocation2] sm:$0xff] %v773
      %784 = vst [vmem:[#allocation2 + $0x8] sm:$0xff] %v776
    $region29: #{encode.1} parent=1 // pred_fallthru
      _
    %p785 = scmp.ne.s32.totalorder 0, 0
    // Predicated region
    $region30: #{encode.1} parent=1 // pred_check
      %p786 = pneg %p785
    $region31: #{encode.1} parent=1 // pred_check_branch
      %788 = sbr.rel (%p786) target = $region33
    $region32: #{encode.1} parent=1 // pred_region
      %v789 = vld [vmem:[#allocation2] sm:$0xff]
      %v790 = vld [vmem:[#allocation2 + $0x8] sm:$0xff]
      %v791 = vadd.f32 %v789, %v773
      %v792 = vadd.f32 %v790, %v776
      %793 = vst [vmem:[#allocation2] sm:$0xff] %v791
      %794 = vst [vmem:[#allocation2 + $0x8] sm:$0xff] %v792
    $region33: #{encode.1} parent=1 // pred_fallthru
      _
    // Predicated region
    $region34: #{encode.1} parent=1 // pred_check
      %p795 = pneg %p779
    $region35: #{encode.1} parent=1 // pred_check_branch
      %797 = sbr.rel (%p795) target = $region37
    $region36: #{encode.1} parent=1 // pred_region
      %v798 = vld [vmem:[#allocation2] sm:$0xff]
      %v799 = vld [vmem:[#allocation2 + $0x8] sm:$0xff]
      %v800 = vld [vmem:[#allocation8] sm:$0x1]
      %v802 = vlaneseq
      %v803 = vshrl.u32 %v802, 7
      %v804 = vsub.s32 0, %v803
      %v805 = vrot.slane %v800, %v804
      %v807 = vadd.f32 %v798, %v805
      %v808 = vadd.f32 %v799, %v805
      %809 = vst [vmem:[#allocation9] sm:$0xff] %v807
      %810 = vst [vmem:[#allocation9 + $0x8] sm:$0xff] %v808
    $region37: #{encode.1} parent=1 // pred_fallthru
      _
    // Predicated region
    $region38: #{encode.1} parent=1 // pred_check
      _
    $region39: #{encode.1} parent=1 // pred_check_branch
      %812 = sbr.rel (0) target = $region41
    $region40: #{encode.1} parent=1 // pred_region
      %s814 = ssub.s32 256, 256
      %815 = vsyncadd [#allocation5], %s814
      %s816 = sshll.u32 [#allocation9], 4
      %s817 = int_to_ptr.vmem [resolvable:$true] %s816
      %822 = dma.vmem_to_hbm [thread:$0]  %s817, 256, %s3, [#allocation5], 128, 128, 8
    $region41: #{encode.1} parent=1 // pred_fallthru
      _
    // Predicated region
    $region42: #{encode.1} parent=1 // pred_check
      _
    $region43: #{encode.1} parent=1 // pred_check_branch
      %824 = sbr.rel (0) target = $region45
    $region44: #{encode.1} parent=1 // pred_region
      %825 = dma.done [#allocation5], 256
    $region45: #{encode.1} parent=1 // pred_fallthru
      _
    %826 = vsyncpa [#allocation4], 1
    %827 = vsyncpa [#allocation7], 1
    %828 = vsyncpa [#allocation5], 1

</llo_original>
